<compile_context>
chip_gen: v7x
topology: tpu7x:2x2x1
jax: 0.10.0
libtpu: 0.0.40
codegen_flags: <defaults>
</compile_context>

<pallas_src>
import jax
import jax.numpy as jnp
from jax.experimental import pallas as pl
from jax.experimental.pallas import tpu as pltpu

K = 3  # kernel size (3, 3)


def _convt_kernel(w_ref, b_ref, x_ref, o_ref, xp_ref):
    # w_ref:  SMEM (K, K)   spatially flipped kernel weights
    # b_ref:  SMEM (1,)     bias
    # x_ref:  VMEM (N, H, W)   unpadded input (whole batch, single block)
    # o_ref:  VMEM (N, Ho, Wo) output (whole batch, single block)
    # xp_ref: VMEM (N, Hp, Wp) scratch: zero-padded input (built in VMEM, no HBM pass)
    n, ho, wo = o_ref.shape
    h, w = x_ref.shape[1], x_ref.shape[2]

    # In-VMEM zero padding: zero the scratch (it is uninitialized / persistent),
    # then write the input into the interior.
    xp_ref[...] = jnp.zeros_like(xp_ref)
    xp_ref[:, K - 1:K - 1 + h, K - 1:K - 1 + w] = x_ref[...].astype(jnp.float32)
    xp = xp_ref[...]                                   # (N, Hp, Wp), f32

    b = b_ref[0]
    # Three independent accumulation chains (one per kernel row) to expose ILP;
    # bias folded into the first chain's initializer.
    accs = [
        jnp.full((n, ho, wo), b, jnp.float32),
        jnp.zeros((n, ho, wo), jnp.float32),
        jnp.zeros((n, ho, wo), jnp.float32),
    ]
    for kh in range(K):                                # static unrolled 3x3 MAC
        a = accs[kh]
        for kw in range(K):
            a = a + w_ref[kh, kw] * xp[:, kh:kh + ho, kw:kw + wo]
        accs[kh] = a
    o_ref[...] = (accs[0] + (accs[1] + accs[2])).astype(o_ref.dtype)


def conv_transpose2d_1x1ch(x_nchw, weight, bias):
    """x_nchw: (N, 1, H, W); weight: (1, 1, K, K) [PyTorch layout]; bias: (1,)."""
    n, c, h, w = x_nchw.shape
    assert c == 1 and weight.shape == (1, 1, K, K) and bias.shape == (1,)
    ho, wo = h + K - 1, w + K - 1
    hp, wp = h + 2 * (K - 1), w + 2 * (K - 1)

    # Glue: squeeze channel, flip kernel spatially (ConvTranspose == full
    # correlation of the padded input with the flipped kernel).
    x3 = x_nchw[:, 0, :, :]                                      # (N, H, W)
    w_flip = weight[0, 0, ::-1, ::-1].astype(jnp.float32)        # (K, K)
    b = bias.astype(jnp.float32)                                 # (1,)

    out = pl.pallas_call(
        _convt_kernel,
        out_shape=jax.ShapeDtypeStruct((n, ho, wo), x_nchw.dtype),
        in_specs=[
            pl.BlockSpec(memory_space=pltpu.MemorySpace.SMEM),   # flipped weights
            pl.BlockSpec(memory_space=pltpu.MemorySpace.SMEM),   # bias
            pl.BlockSpec(memory_space=pltpu.MemorySpace.VMEM),   # unpadded x, 1 block
        ],
        out_specs=pl.BlockSpec(memory_space=pltpu.MemorySpace.VMEM),
        scratch_shapes=[pltpu.VMEM((n, hp, wp), jnp.float32)],   # padded-x scratch
    )(w_flip, b, x3)

    return out[:, None, :, :]  # back to NCHW: (N, 1, Ho, Wo)


if __name__ == "__main__":
    key = jax.random.PRNGKey(0)
    k_x, k_w, k_b = jax.random.split(key, 3)

    # Deterministic parameter init (PyTorch shapes for ConvTranspose2d(1,1,(3,3))).
    fan_in = 1 * K * K
    bound = 1.0 / (fan_in ** 0.5)
    weight = jax.random.uniform(k_w, (1, 1, K, K), jnp.float32, -bound, bound)
    bias = jax.random.uniform(k_b, (1,), jnp.float32, -bound, bound)

    # Small NCHW input: batch=2, channels=1, spatial=16.
    x = jax.random.normal(k_x, (2, 1, 16, 16), jnp.float32)

    y = conv_transpose2d_1x1ch(x, weight, bias)
    jax.block_until_ready(y)

    # Reference: the *definition* of ConvTranspose2d (stride=1, padding=0):
    # every input pixel scatters (x[i,j] * weight) into the output window at
    # (i, j), plus bias.  This is exactly PyTorch's semantics (grad of Conv2d
    # w.r.t. its input) with no kernel-flip ambiguity.
    n, _, h, w = x.shape
    ref = jnp.zeros((n, 1, h + K - 1, w + K - 1), jnp.float32)
    for kh in range(K):
        for kw in range(K):
            ref = ref.at[:, :, kh:kh + h, kw:kw + w].add(x * weight[0, 0, kh, kw])
    ref = ref + bias[None, :, None, None]

    assert y.shape == (2, 1, 18, 18)
    assert jnp.allclose(y, ref, atol=1e-5, rtol=1e-5)

    print("KERNEL_OK")
</pallas_src>

<mosaic_0001>
module attributes {stable_mosaic.version = 11 : i64} {
  func.func @_convt_kernel(%arg0: memref<3x3xf32, #tpu.memory_space<smem>>, %arg1: memref<1xf32, #tpu.memory_space<smem>>, %arg2: memref<2x16x16xf32, #tpu.memory_space<vmem>>, %arg3: memref<2x18x18xf32, #tpu.memory_space<vmem>>, %arg4: memref<2x20x20xf32, #tpu.memory_space<vmem>>) attributes {dimension_semantics = [], scalar_prefetch = 0 : i64, scratch_operands = 1 : i64, tpu.core_type = #tpu.core_type<tc>} {
    %cst = arith.constant 0.000000e+00 : f32
    %0 = vector.broadcast %cst : f32 to vector<2x20x20xf32>
    %c0 = arith.constant 0 : index
    %c0_0 = arith.constant 0 : index
    %c0_1 = arith.constant 0 : index
    %1 = vector.load %arg4[%c0, %c0_0, %c0_1] : memref<2x20x20xf32, #tpu.memory_space<vmem>>, vector<2x20x20xf32>
    tpu.vector_store %arg4[%c0, %c0_0, %c0_1], %0 {strides = array<i32>} : memref<2x20x20xf32, #tpu.memory_space<vmem>>, vector<2x20x20xf32>,
    %c0_2 = arith.constant 0 : index
    %c0_3 = arith.constant 0 : index
    %c0_4 = arith.constant 0 : index
    %2 = vector.load %arg2[%c0_2, %c0_3, %c0_4] : memref<2x16x16xf32, #tpu.memory_space<vmem>>, vector<2x16x16xf32>
    %c0_5 = arith.constant 0 : index
    %c2 = arith.constant 2 : index
    %c2_6 = arith.constant 2 : index
    %3 = vector.load %arg4[%c0_5, %c2, %c2_6] : memref<2x20x20xf32, #tpu.memory_space<vmem>>, vector<2x16x16xf32>
    tpu.vector_store %arg4[%c0_5, %c2, %c2_6], %2 {strides = array<i32>} : memref<2x20x20xf32, #tpu.memory_space<vmem>>, vector<2x16x16xf32>,
    %c0_7 = arith.constant 0 : index
    %c0_8 = arith.constant 0 : index
    %c0_9 = arith.constant 0 : index
    %4 = vector.load %arg4[%c0_7, %c0_8, %c0_9] : memref<2x20x20xf32, #tpu.memory_space<vmem>>, vector<2x20x20xf32>
    %c0_10 = arith.constant 0 : index
    %5 = memref.load %arg1[%c0_10] : memref<1xf32, #tpu.memory_space<smem>>
    %6 = vector.broadcast %5 : f32 to vector<2x18x18xf32>
    %cst_11 = arith.constant 0.000000e+00 : f32
    %7 = vector.broadcast %cst_11 : f32 to vector<2x18x18xf32>
    %cst_12 = arith.constant 0.000000e+00 : f32
    %8 = vector.broadcast %cst_12 : f32 to vector<2x18x18xf32>
    %c0_13 = arith.constant 0 : index
    %c0_14 = arith.constant 0 : index
    %9 = memref.load %arg0[%c0_13, %c0_14] : memref<3x3xf32, #tpu.memory_space<smem>>
    %10 = vector.extract_strided_slice %4 {offsets = [0, 0, 0], sizes = [2, 18, 18], strides = [1, 1, 1]} : vector<2x20x20xf32> to vector<2x18x18xf32>
    %11 = vector.broadcast %9 : f32 to vector<2x18x18xf32>
    %12 = arith.mulf %11, %10 : vector<2x18x18xf32>
    %13 = arith.addf %6, %12 : vector<2x18x18xf32>
    %c0_15 = arith.constant 0 : index
    %c1 = arith.constant 1 : index
    %14 = memref.load %arg0[%c0_15, %c1] : memref<3x3xf32, #tpu.memory_space<smem>>
    %15 = vector.extract_strided_slice %4 {offsets = [0, 0, 1], sizes = [2, 18, 18], strides = [1, 1, 1]} : vector<2x20x20xf32> to vector<2x18x18xf32>
    %16 = vector.broadcast %14 : f32 to vector<2x18x18xf32>
    %17 = arith.mulf %16, %15 : vector<2x18x18xf32>
    %18 = arith.addf %13, %17 : vector<2x18x18xf32>
    %c0_16 = arith.constant 0 : index
    %c2_17 = arith.constant 2 : index
    %19 = memref.load %arg0[%c0_16, %c2_17] : memref<3x3xf32, #tpu.memory_space<smem>>
    %20 = vector.extract_strided_slice %4 {offsets = [0, 0, 2], sizes = [2, 18, 18], strides = [1, 1, 1]} : vector<2x20x20xf32> to vector<2x18x18xf32>
    %21 = vector.broadcast %19 : f32 to vector<2x18x18xf32>
    %22 = arith.mulf %21, %20 : vector<2x18x18xf32>
    %23 = arith.addf %18, %22 : vector<2x18x18xf32>
    %c1_18 = arith.constant 1 : index
    %c0_19 = arith.constant 0 : index
    %24 = memref.load %arg0[%c1_18, %c0_19] : memref<3x3xf32, #tpu.memory_space<smem>>
    %25 = vector.extract_strided_slice %4 {offsets = [0, 1, 0], sizes = [2, 18, 18], strides = [1, 1, 1]} : vector<2x20x20xf32> to vector<2x18x18xf32>
    %26 = vector.broadcast %24 : f32 to vector<2x18x18xf32>
    %27 = arith.mulf %26, %25 : vector<2x18x18xf32>
    %28 = arith.addf %7, %27 : vector<2x18x18xf32>
    %c1_20 = arith.constant 1 : index
    %c1_21 = arith.constant 1 : index
    %29 = memref.load %arg0[%c1_20, %c1_21] : memref<3x3xf32, #tpu.memory_space<smem>>
    %30 = vector.extract_strided_slice %4 {offsets = [0, 1, 1], sizes = [2, 18, 18], strides = [1, 1, 1]} : vector<2x20x20xf32> to vector<2x18x18xf32>
    %31 = vector.broadcast %29 : f32 to vector<2x18x18xf32>
    %32 = arith.mulf %31, %30 : vector<2x18x18xf32>
    %33 = arith.addf %28, %32 : vector<2x18x18xf32>
    %c1_22 = arith.constant 1 : index
    %c2_23 = arith.constant 2 : index
    %34 = memref.load %arg0[%c1_22, %c2_23] : memref<3x3xf32, #tpu.memory_space<smem>>
    %35 = vector.extract_strided_slice %4 {offsets = [0, 1, 2], sizes = [2, 18, 18], strides = [1, 1, 1]} : vector<2x20x20xf32> to vector<2x18x18xf32>
    %36 = vector.broadcast %34 : f32 to vector<2x18x18xf32>
    %37 = arith.mulf %36, %35 : vector<2x18x18xf32>
    %38 = arith.addf %33, %37 : vector<2x18x18xf32>
    %c2_24 = arith.constant 2 : index
    %c0_25 = arith.constant 0 : index
    %39 = memref.load %arg0[%c2_24, %c0_25] : memref<3x3xf32, #tpu.memory_space<smem>>
    %40 = vector.extract_strided_slice %4 {offsets = [0, 2, 0], sizes = [2, 18, 18], strides = [1, 1, 1]} : vector<2x20x20xf32> to vector<2x18x18xf32>
    %41 = vector.broadcast %39 : f32 to vector<2x18x18xf32>
    %42 = arith.mulf %41, %40 : vector<2x18x18xf32>
    %43 = arith.addf %8, %42 : vector<2x18x18xf32>
    %c2_26 = arith.constant 2 : index
    %c1_27 = arith.constant 1 : index
    %44 = memref.load %arg0[%c2_26, %c1_27] : memref<3x3xf32, #tpu.memory_space<smem>>
    %45 = vector.extract_strided_slice %4 {offsets = [0, 2, 1], sizes = [2, 18, 18], strides = [1, 1, 1]} : vector<2x20x20xf32> to vector<2x18x18xf32>
    %46 = vector.broadcast %44 : f32 to vector<2x18x18xf32>
    %47 = arith.mulf %46, %45 : vector<2x18x18xf32>
    %48 = arith.addf %43, %47 : vector<2x18x18xf32>
    %c2_28 = arith.constant 2 : index
    %c2_29 = arith.constant 2 : index
    %49 = memref.load %arg0[%c2_28, %c2_29] : memref<3x3xf32, #tpu.memory_space<smem>>
    %50 = vector.extract_strided_slice %4 {offsets = [0, 2, 2], sizes = [2, 18, 18], strides = [1, 1, 1]} : vector<2x20x20xf32> to vector<2x18x18xf32>
    %51 = vector.broadcast %49 : f32 to vector<2x18x18xf32>
    %52 = arith.mulf %51, %50 : vector<2x18x18xf32>
    %53 = arith.addf %48, %52 : vector<2x18x18xf32>
    %54 = arith.addf %38, %53 : vector<2x18x18xf32>
    %55 = arith.addf %23, %54 : vector<2x18x18xf32>
    %c0_30 = arith.constant 0 : index
    %c0_31 = arith.constant 0 : index
    %c0_32 = arith.constant 0 : index
    %56 = vector.load %arg3[%c0_30, %c0_31, %c0_32] : memref<2x18x18xf32, #tpu.memory_space<vmem>>, vector<2x18x18xf32>
    tpu.vector_store %arg3[%c0_30, %c0_31, %c0_32], %55 {strides = array<i32>} : memref<2x18x18xf32, #tpu.memory_space<vmem>>, vector<2x18x18xf32>,
    return
  }
}

</mosaic_0001>

<llo_original>
// kernel: tpu_custom_call.1
$region0: #{tpu_custom_call.1}
  #allocation0 [shape = 'u32[]', space=smem, size = 0x4, offset = 0x4, fixed_abs, tag = 'smem constant byte address 0x4 - core index']
  #allocation1 [shape = 'u32[144,128]{1,0:T(1,128)}', space=vmem, size = 0x12000, scoped, tag = 'internal scratch']
  #allocation2 [shape = 'f32[2,20,20]{2,1,0:T(8,128)}', space=vmem, size = 0x6000, scoped, tag = 'scratch operand']
  #allocation3 [shape = 'f32[1]{0:T(128)S(6)}', space=smem, size = 0x200, scoped, tag = 'scoped memory for tpu_custom_call.1']
  %s0 = inlined_call_operand.hbm [shape: f32[3,3], index: 0, kind: input, shape index: {}]
  %s1 = inlined_call_operand.<no memory space> [shape: f32[1], index: 1, kind: input, shape index: {}]
  %s2 = inlined_call_operand.hbm [shape: f32[2,16,16], index: 2, kind: input, shape index: {}]
  %s3 = inlined_call_operand.vmem [shape: f32[2,18,18], index: 3, kind: output, shape index: {}]
  %s4 = sld [smem:[#allocation0]]
  $region30: #{tpu_custom_call.1} parent=0
    _
  %s6 = ssub.s32 1, %s4
  %s7 = scalar_select 0, %s6, %s4
  %8 = sst [smem:[#allocation3]] %s1
  $region1: #{tpu_custom_call.1} parent=0
    #allocation4 [shape = 'u8[2048]{0}', space=smem, size = 0x800, scoped, tag = 'input window, operand 0, single buffered']
    #allocation5 [shape = 's32[1]{0}', space=sflag, size = 0x4, scoped, tag = 'scoped memory for tpu_custom_call.1']
    #allocation6 [shape = 's32[1]{0}', space=sflag, size = 0x4, scoped, tag = 'scoped memory for tpu_custom_call.1']
    #allocation7 [shape = 'u8[16384]{0}', space=vmem, size = 0x4000, scoped, tag = 'input window, operand 2, single buffered']
    %9 = vsyncpa [#allocation6], 0
    %10 = vsyncpa [#allocation5], 0
    // Predicated region
    $region2: #{tpu_custom_call.1} parent=1 // pred_check
      _
    $region3: #{tpu_custom_call.1} parent=1 // pred_check_branch
      %12 = sbr.rel (0) target = $region5
    $region4: #{tpu_custom_call.1} parent=1 // pred_region
      %s14 = ssub.s32 64, 64
      %15 = vsyncadd [#allocation6], %s14
      %18 = dma.hbm_to_smem %s0, 64, [#allocation4], [#allocation6]
    $region5: #{tpu_custom_call.1} parent=1 // pred_fallthru
      _
    // Predicated region
    $region6: #{tpu_custom_call.1} parent=1 // pred_check
      _
    $region7: #{tpu_custom_call.1} parent=1 // pred_check_branch
      %20 = sbr.rel (0) target = $region9
    $region8: #{tpu_custom_call.1} parent=1 // pred_region
      _
    $region9: #{tpu_custom_call.1} parent=1 // pred_fallthru
      _
    // Predicated region
    $region10: #{tpu_custom_call.1} parent=1 // pred_check
      _
    $region11: #{tpu_custom_call.1} parent=1 // pred_check_branch
      %22 = sbr.rel (0) target = $region13
    $region12: #{tpu_custom_call.1} parent=1 // pred_region
      %s24 = ssub.s32 512, 512
      %25 = vsyncadd [#allocation5], %s24
      %s26 = sshll.u32 [#allocation7], 4
      %s27 = int_to_ptr.vmem [resolvable:$true] %s26
      %32 = dma.hbm_to_vmem [thread:$0]  %s2, 512, %s27, [#allocation5], 128, 128, 8
    $region13: #{tpu_custom_call.1} parent=1 // pred_fallthru
      _
    // Predicated region
    $region14: #{tpu_custom_call.1} parent=1 // pred_check
      _
    $region15: #{tpu_custom_call.1} parent=1 // pred_check_branch
      %34 = sbr.rel (0) target = $region17
    $region16: #{tpu_custom_call.1} parent=1 // pred_region
      %35 = dma.done [#allocation6], 64
    $region17: #{tpu_custom_call.1} parent=1 // pred_fallthru
      _
    // Predicated region
    $region18: #{tpu_custom_call.1} parent=1 // pred_check
      _
    $region19: #{tpu_custom_call.1} parent=1 // pred_check_branch
      %37 = sbr.rel (0) target = $region21
    $region20: #{tpu_custom_call.1} parent=1 // pred_region
      %38 = dma.done [#allocation5], 512
    $region21: #{tpu_custom_call.1} parent=1 // pred_fallthru
      _
    %39 = sfence
    %vm40 = vcmask 162816
    %41 = vst.msk [vmem:[#allocation2] sm:$0xff] %vm40, 0.0
    %42 = vst.msk [vmem:[#allocation2 + $0x8] sm:$0xff] %vm40, 0.0
    %vm43 = vcmask 158720
    %44 = vst.msk [vmem:[#allocation2 + $0x10] sm:$0xf] %vm43, 0.0
    %45 = vst.msk [vmem:[#allocation2 + $0x18] sm:$0xff] %vm40, 0.0
    %46 = vst.msk [vmem:[#allocation2 + $0x20] sm:$0xff] %vm40, 0.0
    %47 = vst.msk [vmem:[#allocation2 + $0x28] sm:$0xf] %vm43, 0.0
    %v48 = vld [vmem:[#allocation7] sm:$0xff]
    %v49 = vld [vmem:[#allocation7 + $0x8] sm:$0xff]
    %v50 = vld [vmem:[#allocation7 + $0x10] sm:$0xff]
    %v51 = vld [vmem:[#allocation7 + $0x18] sm:$0xff]
    %56 = vrot.lane.b32.xlu0 %v48, 2
    %v57 = vpop.permute.xlu0 %56
    %58 = vrot.lane.b32.xlu0 %v49, 2
    %v59 = vpop.permute.xlu0 %58
    %60 = vrot.lane.b32.xlu0 %v50, 2
    %v61 = vpop.permute.xlu0 %60
    %62 = vrot.lane.b32.xlu0 %v51, 2
    %v63 = vpop.permute.xlu0 %62
    %vm68 = vcmask 146448
    %69 = vst.msk [vmem:[#allocation2 + $0x2] sm:$0xff] %vm68, %v57
    %70 = vst.msk [vmem:[#allocation2 + $0xa] sm:$0xff] %vm68, %v59
    %71 = vst.msk [vmem:[#allocation2 + $0x1a] sm:$0xff] %vm68, %v61
    %72 = vst.msk [vmem:[#allocation2 + $0x22] sm:$0xff] %vm68, %v63
    %v73 = vld [vmem:[#allocation2] sm:$0xff]
    %v74 = vld [vmem:[#allocation2 + $0x8] sm:$0xff]
    %v75 = vld [vmem:[#allocation2 + $0x10] sm:$0xf]
    %v76 = vld [vmem:[#allocation2 + $0x18] sm:$0xff]
    %v77 = vld [vmem:[#allocation2 + $0x20] sm:$0xff]
    %v78 = vld [vmem:[#allocation2 + $0x28] sm:$0xf]
    %s79 = sld [smem:[#allocation3]]
    %v80 = vstv %s79
    %s81 = sld [smem:[#allocation4]]
    %v82 = vstv %s81
    %v83 = vmul.f32 %v82, %v73
    %v84 = vmul.f32 %v82, %v74
    %v85 = vmul.f32 %v82, %v75
    %v86 = vmul.f32 %v82, %v76
    %v87 = vmul.f32 %v82, %v77
    %v88 = vmul.f32 %v82, %v78
    %v89 = vadd.f32 %v80, %v83
    %v90 = vadd.f32 %v80, %v84
    %v91 = vadd.f32 %v80, %v85
    %v92 = vadd.f32 %v80, %v86
    %v93 = vadd.f32 %v80, %v87
    %v94 = vadd.f32 %v80, %v88
    %s95 = sld [smem:[#allocation4 + $0x1]]
    %v96 = vstv %s95
    %v97 = vmul.f32 %v96, %v73
    %v98 = vmul.f32 %v96, %v74
    %v99 = vmul.f32 %v96, %v75
    %v100 = vmul.f32 %v96, %v76
    %v101 = vmul.f32 %v96, %v77
    %v102 = vmul.f32 %v96, %v78
    %109 = vrot.lane.b32.xlu0 %v97, 127
    %v110 = vpop.permute.xlu0 %109
    %111 = vrot.lane.b32.xlu0 %v98, 127
    %v112 = vpop.permute.xlu0 %111
    %113 = vrot.lane.b32.xlu0 %v99, 127
    %v114 = vpop.permute.xlu0 %113
    %115 = vrot.lane.b32.xlu0 %v100, 127
    %v116 = vpop.permute.xlu0 %115
    %117 = vrot.lane.b32.xlu0 %v101, 127
    %v118 = vpop.permute.xlu0 %117
    %119 = vrot.lane.b32.xlu0 %v102, 127
    %v120 = vpop.permute.xlu0 %119
    %v127 = vadd.f32 %v89, %v110
    %v128 = vadd.f32 %v90, %v112
    %v129 = vadd.f32 %v91, %v114
    %v130 = vadd.f32 %v92, %v116
    %v131 = vadd.f32 %v93, %v118
    %v132 = vadd.f32 %v94, %v120
    %s133 = sld [smem:[#allocation4 + $0x2]]
    %v134 = vstv %s133
    %v135 = vmul.f32 %v134, %v73
    %v136 = vmul.f32 %v134, %v74
    %v137 = vmul.f32 %v134, %v75
    %v138 = vmul.f32 %v134, %v76
    %v139 = vmul.f32 %v134, %v77
    %v140 = vmul.f32 %v134, %v78
    %147 = vrot.lane.b32.xlu0 %v135, 126
    %v148 = vpop.permute.xlu0 %147
    %149 = vrot.lane.b32.xlu0 %v136, 126
    %v150 = vpop.permute.xlu0 %149
    %151 = vrot.lane.b32.xlu0 %v137, 126
    %v152 = vpop.permute.xlu0 %151
    %153 = vrot.lane.b32.xlu0 %v138, 126
    %v154 = vpop.permute.xlu0 %153
    %155 = vrot.lane.b32.xlu0 %v139, 126
    %v156 = vpop.permute.xlu0 %155
    %157 = vrot.lane.b32.xlu0 %v140, 126
    %v158 = vpop.permute.xlu0 %157
    %v165 = vadd.f32 %v127, %v148
    %v166 = vadd.f32 %v128, %v150
    %v167 = vadd.f32 %v129, %v152
    %v168 = vadd.f32 %v130, %v154
    %v169 = vadd.f32 %v131, %v156
    %v170 = vadd.f32 %v132, %v158
    %s171 = sld [smem:[#allocation4 + $0x80]]
    %v172 = vstv %s171
    %v173 = vmul.f32 %v172, %v73
    %v174 = vmul.f32 %v172, %v74
    %v175 = vmul.f32 %v172, %v75
    %v176 = vmul.f32 %v172, %v76
    %v177 = vmul.f32 %v172, %v77
    %v178 = vmul.f32 %v172, %v78
    %v179 = vadd.f32 %v173, 0.0
    %v180 = vadd.f32 %v174, 0.0
    %v181 = vadd.f32 %v175, 0.0
    %v182 = vadd.f32 %v176, 0.0
    %v183 = vadd.f32 %v177, 0.0
    %v184 = vadd.f32 %v178, 0.0
    %s185 = sld [smem:[#allocation4 + $0x81]]
    %v186 = vstv %s185
    %v187 = vmul.f32 %v186, %v73
    %v188 = vmul.f32 %v186, %v74
    %v189 = vmul.f32 %v186, %v75
    %v190 = vmul.f32 %v186, %v76
    %v191 = vmul.f32 %v186, %v77
    %v192 = vmul.f32 %v186, %v78
    %199 = vrot.lane.b32.xlu0 %v187, 127
    %v200 = vpop.permute.xlu0 %199
    %201 = vrot.lane.b32.xlu0 %v188, 127
    %v202 = vpop.permute.xlu0 %201
    %203 = vrot.lane.b32.xlu0 %v189, 127
    %v204 = vpop.permute.xlu0 %203
    %205 = vrot.lane.b32.xlu0 %v190, 127
    %v206 = vpop.permute.xlu0 %205
    %207 = vrot.lane.b32.xlu0 %v191, 127
    %v208 = vpop.permute.xlu0 %207
    %209 = vrot.lane.b32.xlu0 %v192, 127
    %v210 = vpop.permute.xlu0 %209
    %v217 = vadd.f32 %v179, %v200
    %v218 = vadd.f32 %v180, %v202
    %v219 = vadd.f32 %v181, %v204
    %v220 = vadd.f32 %v182, %v206
    %v221 = vadd.f32 %v183, %v208
    %v222 = vadd.f32 %v184, %v210
    %s223 = sld [smem:[#allocation4 + $0x82]]
    %v224 = vstv %s223
    %v225 = vmul.f32 %v224, %v73
    %v226 = vmul.f32 %v224, %v74
    %v227 = vmul.f32 %v224, %v75
    %v228 = vmul.f32 %v224, %v76
    %v229 = vmul.f32 %v224, %v77
    %v230 = vmul.f32 %v224, %v78
    %237 = vrot.lane.b32.xlu0 %v225, 126
    %v238 = vpop.permute.xlu0 %237
    %239 = vrot.lane.b32.xlu0 %v226, 126
    %v240 = vpop.permute.xlu0 %239
    %241 = vrot.lane.b32.xlu0 %v227, 126
    %v242 = vpop.permute.xlu0 %241
    %243 = vrot.lane.b32.xlu0 %v228, 126
    %v244 = vpop.permute.xlu0 %243
    %245 = vrot.lane.b32.xlu0 %v229, 126
    %v246 = vpop.permute.xlu0 %245
    %247 = vrot.lane.b32.xlu0 %v230, 126
    %v248 = vpop.permute.xlu0 %247
    %v255 = vadd.f32 %v217, %v238
    %v256 = vadd.f32 %v218, %v240
    %v257 = vadd.f32 %v219, %v242
    %v258 = vadd.f32 %v220, %v244
    %v259 = vadd.f32 %v221, %v246
    %v260 = vadd.f32 %v222, %v248
    %s261 = sld [smem:[#allocation4 + $0x100]]
    %v262 = vstv %s261
    %v263 = vmul.f32 %v262, %v73
    %v264 = vmul.f32 %v262, %v74
    %v265 = vmul.f32 %v262, %v75
    %v266 = vmul.f32 %v262, %v76
    %v267 = vmul.f32 %v262, %v77
    %v268 = vmul.f32 %v262, %v78
    %v269 = vadd.f32 %v263, 0.0
    %v270 = vadd.f32 %v264, 0.0
    %v271 = vadd.f32 %v265, 0.0
    %v272 = vadd.f32 %v266, 0.0
    %v273 = vadd.f32 %v267, 0.0
    %v274 = vadd.f32 %v268, 0.0
    %s275 = sld [smem:[#allocation4 + $0x101]]
    %v276 = vstv %s275
    %v277 = vmul.f32 %v276, %v73
    %v278 = vmul.f32 %v276, %v74
    %v279 = vmul.f32 %v276, %v75
    %v280 = vmul.f32 %v276, %v76
    %v281 = vmul.f32 %v276, %v77
    %v282 = vmul.f32 %v276, %v78
    %289 = vrot.lane.b32.xlu0 %v277, 127
    %v290 = vpop.permute.xlu0 %289
    %291 = vrot.lane.b32.xlu0 %v278, 127
    %v292 = vpop.permute.xlu0 %291
    %293 = vrot.lane.b32.xlu0 %v279, 127
    %v294 = vpop.permute.xlu0 %293
    %295 = vrot.lane.b32.xlu0 %v280, 127
    %v296 = vpop.permute.xlu0 %295
    %297 = vrot.lane.b32.xlu0 %v281, 127
    %v298 = vpop.permute.xlu0 %297
    %299 = vrot.lane.b32.xlu0 %v282, 127
    %v300 = vpop.permute.xlu0 %299
    %v307 = vadd.f32 %v269, %v290
    %v308 = vadd.f32 %v270, %v292
    %v309 = vadd.f32 %v271, %v294
    %v310 = vadd.f32 %v272, %v296
    %v311 = vadd.f32 %v273, %v298
    %v312 = vadd.f32 %v274, %v300
    %s313 = sld [smem:[#allocation4 + $0x102]]
    %v314 = vstv %s313
    %v315 = vmul.f32 %v314, %v73
    %v316 = vmul.f32 %v314, %v74
    %v317 = vmul.f32 %v314, %v75
    %v318 = vmul.f32 %v314, %v76
    %v319 = vmul.f32 %v314, %v77
    %v320 = vmul.f32 %v314, %v78
    %327 = vrot.lane.b32.xlu0 %v315, 126
    %v328 = vpop.permute.xlu0 %327
    %329 = vrot.lane.b32.xlu0 %v316, 126
    %v330 = vpop.permute.xlu0 %329
    %331 = vrot.lane.b32.xlu0 %v317, 126
    %v332 = vpop.permute.xlu0 %331
    %333 = vrot.lane.b32.xlu0 %v318, 126
    %v334 = vpop.permute.xlu0 %333
    %335 = vrot.lane.b32.xlu0 %v319, 126
    %v336 = vpop.permute.xlu0 %335
    %337 = vrot.lane.b32.xlu0 %v320, 126
    %v338 = vpop.permute.xlu0 %337
    %v345 = vadd.f32 %v307, %v328
    %v346 = vadd.f32 %v308, %v330
    %v347 = vadd.f32 %v309, %v332
    %v348 = vadd.f32 %v310, %v334
    %v349 = vadd.f32 %v311, %v336
    %v350 = vadd.f32 %v312, %v338
    %vm357 = vcmask 1046528
    %v358 = vrot.slane %v345, 1
    %v359 = vrot.slane %v346, 1
    %v360 = vsel %vm357, %v358, %v359
    %v361 = vrot.slane %v347, 1
    %v362 = vsel %vm357, %v359, %v361
    %v363 = vrot.slane %v348, 1
    %v364 = vrot.slane %v349, 1
    %v365 = vsel %vm357, %v363, %v364
    %v366 = vrot.slane %v350, 1
    %v367 = vsel %vm357, %v364, %v366
    %v374 = vadd.f32 %v255, %v360
    %v375 = vadd.f32 %v256, %v362
    %v376 = vadd.f32 %v257, %v361
    %v377 = vadd.f32 %v258, %v365
    %v378 = vadd.f32 %v259, %v367
    %v379 = vadd.f32 %v260, %v366
    %v386 = vrot.slane %v374, 1
    %v387 = vrot.slane %v375, 1
    %v388 = vsel %vm357, %v386, %v387
    %v389 = vrot.slane %v376, 1
    %v390 = vsel %vm357, %v387, %v389
    %v391 = vrot.slane %v377, 1
    %v392 = vrot.slane %v378, 1
    %v393 = vsel %vm357, %v391, %v392
    %v394 = vrot.slane %v379, 1
    %v395 = vsel %vm357, %v392, %v394
    %v402 = vadd.f32 %v165, %v388
    %v403 = vadd.f32 %v166, %v390
    %v404 = vadd.f32 %v167, %v389
    %v405 = vadd.f32 %v168, %v393
    %v406 = vadd.f32 %v169, %v395
    %v407 = vadd.f32 %v170, %v394
    %vm408 = vcmask 146432
    %409 = vst.msk [vmem:[%s3] sm:$0xff] %vm408, %v402
    %410 = vst.msk [vmem:[%s3 + $0x8] sm:$0xff] %vm408, %v403
    %vm411 = vcmask 140288
    %412 = vst.msk [vmem:[%s3 + $0x10] sm:$0x3] %vm411, %v404
    %413 = vst.msk [vmem:[%s3 + $0x18] sm:$0xff] %vm408, %v405
    %414 = vst.msk [vmem:[%s3 + $0x20] sm:$0xff] %vm408, %v406
    %415 = vst.msk [vmem:[%s3 + $0x28] sm:$0x3] %vm411, %v407
    // Predicated region
    $region22: #{tpu_custom_call.1} parent=1 // pred_check
      _
    $region23: #{tpu_custom_call.1} parent=1 // pred_check_branch
      %417 = sbr.rel (0) target = $region25
    $region24: #{tpu_custom_call.1} parent=1 // pred_region
      _
    $region25: #{tpu_custom_call.1} parent=1 // pred_fallthru
      _
    // Predicated region
    $region26: #{tpu_custom_call.1} parent=1 // pred_check
      _
    $region27: #{tpu_custom_call.1} parent=1 // pred_check_branch
      %419 = sbr.rel (0) target = $region29
    $region28: #{tpu_custom_call.1} parent=1 // pred_region
      _
    $region29: #{tpu_custom_call.1} parent=1 // pred_fallthru
      _
    %420 = vsyncpa [#allocation5], 1
    %421 = vsyncpa [#allocation6], 1

</llo_original>
